<compile_context>
chip_gen: v6e
topology: v6e:2x2x1
jax: 0.10.0
libtpu: 0.0.40
codegen_flags: <defaults>
</compile_context>

<pallas_src>
import functools

import jax
import jax.numpy as jnp
from jax import lax
from jax.experimental import pallas as pl
from jax.experimental.pallas import tpu as pltpu


def _round_up(n, m):
    return ((n + m - 1) // m) * m


# ---------------------------------------------------------------------------
# Kernel
# ---------------------------------------------------------------------------
def club_kernel(x_ref, y_ref, ystats_ref, p_ref, out_ref, acc_ref, *,
                hidden, y_dim, y_pad, n_true, r_b1, r_w2, r_b2):
    tm, x_dim = x_ref.shape
    y2p = 2 * y_pad                       # fused, lane-aligned output width
    step = pl.program_id(1)
    n_steps = pl.num_programs(1)

    @pl.when(step == 0)
    def _init():
        acc_ref[...] = jnp.zeros_like(acc_ref)

    # ---- fused 2-layer MLP (p_mu || p_logvar): two bf16 MXU pushes, f32 acc --
    x = x_ref[...]                                           # bf16 [tm, x_dim]
    w1 = p_ref[0:x_dim, 0:hidden]                            # bf16 [x_dim, H]
    b1 = p_ref[r_b1:r_b1 + 1, 0:hidden]                      # bf16 [1, H]
    h = jnp.maximum(
        jnp.dot(x, w1, preferred_element_type=jnp.float32) + b1, 0.0)

    w2 = p_ref[r_w2:r_w2 + hidden, 0:y2p]                    # bf16 blockdiag [H, 2*y_pad]
    b2 = p_ref[r_b2:r_b2 + 1, 0:y2p]                         # bf16 [1, 2*y_pad]
    out2 = jnp.dot(h.astype(jnp.bfloat16), w2,
                   preferred_element_type=jnp.float32) + b2  # f32 [tm, 2*y_pad]

    # Lane-aligned split: mu occupies cols [0, y_pad), logvar [y_pad, 2*y_pad).
    mu = out2[:, 0:y_dim]
    logvar = jnp.tanh(out2[:, y_pad:y_pad + y_dim])

    # ---- CLUB terms: stable closed-form negative, single exp, no divides ----
    y = y_ref[...]                                           # f32 [tm, y_dim]
    ey = ystats_ref[0:1, :]                                  # E[y]    [1, y_dim]
    var_y = ystats_ref[1:2, :]                               # Var(y)  [1, y_dim]

    half_inv = 0.5 * jnp.exp(-logvar)                        # 1 / (2 var)
    d = ey - mu
    # positive - negative, per (sample, feature):
    #   [ mean_j (y_j - mu)^2  -  (y - mu)^2 ] / (2 var)
    term = (var_y + d * d - (y - mu) ** 2) * half_inv

    row0 = (pl.program_id(0) * n_steps + step) * tm
    row_id = lax.broadcasted_iota(jnp.int32, (tm, 1), 0) + row0
    acc_ref[...] += jnp.where(row_id < n_true, term, 0.0)    # mask padded rows

    @pl.when(step == n_steps - 1)
    def _finalize():
        tot = jnp.sum(acc_ref[...], axis=1, keepdims=True)   # [tm, 1]
        tot = jnp.sum(tot, axis=0, keepdims=True)            # [1, 1]
        out_ref[...] = (jnp.zeros(out_ref.shape, out_ref.dtype)
                        + tot * (1.0 / n_true))


# ---------------------------------------------------------------------------
# Host-side param packing (one bf16 slab, aligned row segments, 128-lane halves)
# ---------------------------------------------------------------------------
def pack_club_params(params, x_dim, y_dim, hidden_size, dtype=jnp.bfloat16):
    """Fuse p_mu / p_logvar weights into one zero-padded slab.

    Row layout (offsets multiples of 16):
      [0      : x_dim   , 0:H            ]  W1 = [W1_mu | W1_logvar]
      [r_b1             , 0:H            ]  b1 = [b1_mu | b1_logvar]
      [r_w2   : r_w2+H  , 0:2*y_pad      ]  W2: W2_mu -> cols [0,y_dim),
                                             W2_logvar -> cols [y_pad, y_pad+y_dim)
      [r_b2             , 0:2*y_pad      ]  b2 likewise (lane-aligned halves)
    """
    w1m, b1m, w2m, b2m, w1v, b1v, w2v, b2v = params
    h2 = hidden_size // 2
    H = 2 * h2
    y_pad = _round_up(y_dim, 128)
    y2p = 2 * y_pad

    r_b1 = _round_up(x_dim, 16)
    r_w2 = r_b1 + 16
    r_b2 = r_w2 + _round_up(H, 16)
    rows = r_b2 + 16
    cols = _round_up(max(H, y2p), 128)

    slab = jnp.zeros((rows, cols), jnp.float32)
    slab = slab.at[:x_dim, 0:h2].set(w1m)
    slab = slab.at[:x_dim, h2:H].set(w1v)
    slab = slab.at[r_b1, 0:h2].set(b1m.reshape(-1))
    slab = slab.at[r_b1, h2:H].set(b1v.reshape(-1))
    slab = slab.at[r_w2:r_w2 + h2, 0:y_dim].set(w2m)
    slab = slab.at[r_w2 + h2:r_w2 + H, y_pad:y_pad + y_dim].set(w2v)
    slab = slab.at[r_b2, 0:y_dim].set(b2m.reshape(-1))
    slab = slab.at[r_b2, y_pad:y_pad + y_dim].set(b2v.reshape(-1))
    slab = slab.astype(dtype)

    meta = dict(hidden=H, y_dim=y_dim, y_pad=y_pad,
                r_b1=r_b1, r_w2=r_w2, r_b2=r_b2)
    return slab, meta


# ---------------------------------------------------------------------------
# Tile-size heuristic (VMEM-budget-driven, grid-depth-1 path for moderate N)
# ---------------------------------------------------------------------------
def _choose_tm(n, x_dim, y_dim, hidden, y_pad, budget_bytes=8 << 20):
    y2p = 2 * y_pad
    per_row = (2 * x_dim * 2          # double-buffered bf16 x tile
               + 2 * y_dim * 4        # double-buffered f32 y tile
               + y_dim * 4            # f32 accumulator scratch
               + 4 * (hidden + 3 * y2p))   # f32 in-kernel temporaries
    tm = budget_bytes // max(per_row, 1)
    tm = int(max(256, min(2048, tm)))
    tm = min(tm, _round_up(n, 16))    # single grid step when everything fits
    return _round_up(tm, 16)


# ---------------------------------------------------------------------------
# Wrapper
# ---------------------------------------------------------------------------
def club_forward(x, y, slab, meta, *, tm=None):
    """Pallas implementation of CLUB.forward(x_samples, y_samples)."""
    n, x_dim = x.shape
    y_dim = meta["y_dim"]
    hidden = meta["hidden"]
    y_pad = meta["y_pad"]
    assert y.shape == (n, y_dim)

    # Per-feature y statistics over the true N samples, in f32 (stable form).
    y_f32 = y.astype(jnp.float32)
    ey = jnp.mean(y_f32, axis=0, keepdims=True)
    var_y = jnp.var(y_f32, axis=0, keepdims=True)
    ystats = jnp.concatenate([ey, var_y], axis=0)            # [2, y_dim] f32

    if tm is None:
        tm = _choose_tm(n, x_dim, y_dim, hidden, y_pad)
    tm = max(16, _round_up(tm, 16))

    steps_total = -(-n // tm)
    num_shards = 2 if steps_total >= 2 else 1                # 2-TC sharding on v7x
    steps_per_shard = -(-steps_total // num_shards)
    n_pad = num_shards * steps_per_shard * tm

    x_b = x.astype(jnp.bfloat16)                             # MXU operand dtype
    if n_pad != n:                                           # only pad when needed
        x_b = jnp.pad(x_b, ((0, n_pad - n), (0, 0)))
        y_p = jnp.pad(y_f32, ((0, n_pad - n), (0, 0)))
    else:
        y_p = y_f32

    kernel = functools.partial(
        club_kernel, hidden=hidden, y_dim=y_dim, y_pad=y_pad, n_true=n,
        r_b1=meta["r_b1"], r_w2=meta["r_w2"], r_b2=meta["r_b2"])

    # VMEM budget for this tiling (safe on v7x's 64 MiB as well as v5e/v6e).
    y2p = 2 * y_pad
    est_bytes = (2 * tm * x_dim * 2
                 + 2 * tm * y_dim * 4
                 + 2 * slab.size * 2
                 + tm * y_dim * 4
                 + 4 * tm * (hidden + 3 * y2p)
                 + num_shards * 8 * 128 * 4
                 + (2 << 20))
    vmem_limit = int(min(48 << 20, max(16 << 20, 2 * est_bytes)))

    out = pl.pallas_call(
        kernel,
        out_shape=jax.ShapeDtypeStruct((num_shards * 8, 128), jnp.float32),
        grid_spec=pltpu.PrefetchScalarGridSpec(
            num_scalar_prefetch=0,
            grid=(num_shards, steps_per_shard),
            in_specs=[
                pl.BlockSpec((tm, x_dim),
                             lambda c, i, S=steps_per_shard: (c * S + i, 0)),
                pl.BlockSpec((tm, y_dim),
                             lambda c, i, S=steps_per_shard: (c * S + i, 0)),
                pl.BlockSpec((2, y_dim), lambda c, i: (0, 0)),       # y stats (resident)
                pl.BlockSpec(slab.shape, lambda c, i: (0, 0)),       # weights (resident)
            ],
            out_specs=pl.BlockSpec((8, 128), lambda c, i: (c, 0)),   # per-shard partial
            scratch_shapes=[pltpu.VMEM((tm, y_dim), jnp.float32)],   # vector accumulator
        ),
        compiler_params=pltpu.CompilerParams(
            dimension_semantics=("parallel", "arbitrary"),
            vmem_limit_bytes=vmem_limit),
    )(x_b, y_p, ystats, slab)

    # Each shard's (8,128) block is filled with its (already /N) partial sum.
    return jnp.sum(out.reshape(num_shards, -1)[:, 0])


# ---------------------------------------------------------------------------
# Deterministic PyTorch-style init (weights stored [in_features, out_features])
# ---------------------------------------------------------------------------
def init_club_params(key, x_dim, y_dim, hidden_size):
    h2 = hidden_size // 2

    def linear(key, fan_in, fan_out):
        kw, kb = jax.random.split(key)
        bound = 1.0 / jnp.sqrt(fan_in)
        w = jax.random.uniform(kw, (fan_in, fan_out), jnp.float32, -bound, bound)
        b = jax.random.uniform(kb, (1, fan_out), jnp.float32, -bound, bound)
        return w, b

    k = jax.random.split(key, 4)
    w1m, b1m = linear(k[0], x_dim, h2)      # p_mu layer 1
    w2m, b2m = linear(k[1], h2, y_dim)      # p_mu layer 2
    w1v, b1v = linear(k[2], x_dim, h2)      # p_logvar layer 1
    w2v, b2v = linear(k[3], h2, y_dim)      # p_logvar layer 2
    return (w1m, b1m, w2m, b2m, w1v, b1v, w2v, b2v)


# ---------------------------------------------------------------------------
# Pure-JAX references (original O(N^2) CLUB forward)
# ---------------------------------------------------------------------------
def ref_club(x, y, params, *, emulate_bf16):
    w1m, b1m, w2m, b2m, w1v, b1v, w2v, b2v = params

    def cast(a):
        return a.astype(jnp.bfloat16) if emulate_bf16 else a.astype(jnp.float32)

    def cast_b(b):
        return (b.astype(jnp.bfloat16).astype(jnp.float32)
                if emulate_bf16 else b)

    def mlp(xx, w1, b1, w2, b2):
        h = jnp.maximum(jnp.dot(cast(xx), cast(w1),
                                preferred_element_type=jnp.float32) + cast_b(b1), 0.0)
        return jnp.dot(cast(h), cast(w2),
                       preferred_element_type=jnp.float32) + cast_b(b2)

    mu = mlp(x, w1m, b1m, w2m, b2m)
    logvar = jnp.tanh(mlp(x, w1v, b1v, w2v, b2v))
    positive = -((mu - y) ** 2) / 2.0 / jnp.exp(logvar)
    diff = y[None, :, :] - mu[:, None, :]
    negative = -jnp.mean(diff * diff, axis=1) / 2.0 / jnp.exp(logvar)
    return jnp.mean(jnp.sum(positive, axis=-1) - jnp.sum(negative, axis=-1))


if __name__ == "__main__":
    X_DIM, Y_DIM, HIDDEN = 16, 8, 32

    key = jax.random.PRNGKey(0)
    k_params, k_x1, k_y1, k_x2, k_y2 = jax.random.split(key, 5)

    params = init_club_params(k_params, X_DIM, Y_DIM, HIDDEN)
    slab, meta = pack_club_params(params, X_DIM, Y_DIM, HIDDEN)

    # Case 1: small N -> grid-depth-1 fast path (single tile, no step overhead).
    N1 = 12
    x1 = jax.random.normal(k_x1, (N1, X_DIM), jnp.float32)
    y1 = jax.random.normal(k_y1, (N1, Y_DIM), jnp.float32)
    r1 = club_forward(x1, y1, slab, meta)
    jax.block_until_ready(r1)

    # Case 2: larger N with a forced small tile -> multi-step grid, 2-way
    # "parallel" shard axis (both TCs on v7x), padded-row masking.
    N2 = 200
    x2 = jax.random.normal(k_x2, (N2, X_DIM), jnp.float32)
    y2 = jax.random.normal(k_y2, (N2, Y_DIM), jnp.float32)
    r2 = club_forward(x2, y2, slab, meta, tm=32)
    jax.block_until_ready(r2)

    for x, y, r in ((x1, y1, r1), (x2, y2, r2)):
        # Tight check against a reference that uses the same bf16 MXU operands.
        ref_bf = ref_club(x, y, params, emulate_bf16=True)
        assert jnp.allclose(r, ref_bf, rtol=2e-3, atol=5e-4), (r, ref_bf)
        # Looser sanity check against the full-f32 original formulation.
        ref_f32 = ref_club(x, y, params, emulate_bf16=False)
        assert jnp.allclose(r, ref_f32, rtol=5e-2, atol=5e-2), (r, ref_f32)

    print("KERNEL_OK")
</pallas_src>

<mosaic_0001>
module attributes {stable_mosaic.version = 11 : i64} {
  func.func @club_kernel(%arg0: i32, %arg1: i32, %arg2: memref<16x16xbf16, #tpu.memory_space<vmem>>, %arg3: memref<16x8xf32, #tpu.memory_space<vmem>>, %arg4: memref<2x8xf32, #tpu.memory_space<vmem>>, %arg5: memref<80x256xbf16, #tpu.memory_space<vmem>>, %arg6: memref<8x128xf32, #tpu.memory_space<vmem>>, %arg7: memref<16x8xf32, #tpu.memory_space<vmem>>) attributes {dimension_semantics = [#tpu.dimension_semantics<parallel>, #tpu.dimension_semantics<arbitrary>], iteration_bounds = array<i64: 1, 1>, scalar_prefetch = 0 : i64, scratch_operands = 1 : i64, tpu.core_type = #tpu.core_type<tc>, window_params = [{transform_indices = @transform_0, window_bounds = array<i64: 16, 16>}, {transform_indices = @transform_1, window_bounds = array<i64: 16, 8>}, {pipeline_mode = #tpu.pipeline_mode<synchronous>, transform_indices = @transform_2, window_bounds = array<i64: 2, 8>}, {pipeline_mode = #tpu.pipeline_mode<synchronous>, transform_indices = @transform_3, window_bounds = array<i64: 80, 256>}, {transform_indices = @transform_4, window_bounds = array<i64: 8, 128>}]} {
    %c0_i32 = arith.constant 0 : i32
    %0 = arith.cmpi eq, %arg1, %c0_i32 : i32
    %1 = arith.extui %0 : i1 to i32
    %c0_i32_0 = arith.constant 0 : i32
    %2 = arith.cmpi ne, %1, %c0_i32_0 : i32
    scf.if %2 {
      %cst_23 = arith.constant 0.000000e+00 : f32
      %57 = vector.broadcast %cst_23 : f32 to vector<16x8xf32>
      %c0_24 = arith.constant 0 : index
      %c0_25 = arith.constant 0 : index
      %58 = vector.load %arg7[%c0_24, %c0_25] : memref<16x8xf32, #tpu.memory_space<vmem>>, vector<16x8xf32>
      tpu.vector_store %arg7[%c0_24, %c0_25], %57 {strides = array<i32>} : memref<16x8xf32, #tpu.memory_space<vmem>>, vector<16x8xf32>,
    } else {
    }
    %c0 = arith.constant 0 : index
    %c0_1 = arith.constant 0 : index
    %3 = vector.load %arg2[%c0, %c0_1] : memref<16x16xbf16, #tpu.memory_space<vmem>>, vector<16x16xbf16>
    %c0_2 = arith.constant 0 : index
    %c0_3 = arith.constant 0 : index
    %4 = vector.load %arg5[%c0_2, %c0_3] : memref<80x256xbf16, #tpu.memory_space<vmem>>, vector<16x32xbf16>
    %c16 = arith.constant 16 : index
    %c0_4 = arith.constant 0 : index
    %5 = vector.load %arg5[%c16, %c0_4] : memref<80x256xbf16, #tpu.memory_space<vmem>>, vector<1x32xbf16>
    %cst = arith.constant dense<0.000000e+00> : vector<16x32xf32>
    %6 = tpu.matmul %3, %4, %cst {dimension_numbers = #tpu.dot_dimension_numbers<[1], [0], [0], [1], [0, 0, 1, 1], [], []>} : vector<16x16xbf16>, vector<16x32xbf16>, vector<16x32xf32> -> vector<16x32xf32>
    %7 = arith.extf %5 : vector<1x32xbf16> to vector<1x32xf32>
    %8 = vector.broadcast %7 : vector<1x32xf32> to vector<16x32xf32>
    %9 = arith.addf %6, %8 : vector<16x32xf32>
    %cst_5 = arith.constant 0.000000e+00 : f32
    %10 = vector.broadcast %cst_5 : f32 to vector<16x32xf32>
    %11 = arith.maximumf %9, %10 : vector<16x32xf32>
    %c32 = arith.constant 32 : index
    %c0_6 = arith.constant 0 : index
    %12 = vector.load %arg5[%c32, %c0_6] : memref<80x256xbf16, #tpu.memory_space<vmem>>, vector<32x256xbf16>
    %c64 = arith.constant 64 : index
    %c0_7 = arith.constant 0 : index
    %13 = vector.load %arg5[%c64, %c0_7] : memref<80x256xbf16, #tpu.memory_space<vmem>>, vector<1x256xbf16>
    %14 = arith.truncf %11 : vector<16x32xf32> to vector<16x32xbf16>
    %cst_8 = arith.constant dense<0.000000e+00> : vector<16x256xf32>
    %15 = tpu.matmul %14, %12, %cst_8 {dimension_numbers = #tpu.dot_dimension_numbers<[1], [0], [0], [1], [0, 0, 1, 1], [], []>} : vector<16x32xbf16>, vector<32x256xbf16>, vector<16x256xf32> -> vector<16x256xf32>
    %16 = arith.extf %13 : vector<1x256xbf16> to vector<1x256xf32>
    %17 = vector.broadcast %16 : vector<1x256xf32> to vector<16x256xf32>
    %18 = arith.addf %15, %17 : vector<16x256xf32>
    %19 = vector.extract_strided_slice %18 {offsets = [0, 0], sizes = [16, 8], strides = [1, 1]} : vector<16x256xf32> to vector<16x8xf32>
    %20 = vector.extract_strided_slice %18 {offsets = [0, 128], sizes = [16, 8], strides = [1, 1]} : vector<16x256xf32> to vector<16x8xf32>
    %21 = math.tanh %20 : vector<16x8xf32>
    %c0_9 = arith.constant 0 : index
    %c0_10 = arith.constant 0 : index
    %22 = vector.load %arg3[%c0_9, %c0_10] : memref<16x8xf32, #tpu.memory_space<vmem>>, vector<16x8xf32>
    %c0_11 = arith.constant 0 : index
    %c0_12 = arith.constant 0 : index
    %23 = vector.load %arg4[%c0_11, %c0_12] : memref<2x8xf32, #tpu.memory_space<vmem>>, vector<1x8xf32>
    %c1 = arith.constant 1 : index
    %c0_13 = arith.constant 0 : index
    %24 = vector.load %arg4[%c1, %c0_13] : memref<2x8xf32, #tpu.memory_space<vmem>>, vector<1x8xf32>
    %cst_14 = arith.constant 0.000000e+00 : f32
    %25 = vector.broadcast %cst_14 : f32 to vector<16x8xf32>
    %26 = arith.subf %25, %21 : vector<16x8xf32>
    %27 = math.exp %26 : vector<16x8xf32>
    %cst_15 = arith.constant 5.000000e-01 : f32
    %28 = vector.broadcast %cst_15 : f32 to vector<16x8xf32>
    %29 = arith.mulf %28, %27 : vector<16x8xf32>
    %30 = vector.broadcast %23 : vector<1x8xf32> to vector<16x8xf32>
    %31 = arith.subf %30, %19 : vector<16x8xf32>
    %32 = arith.mulf %31, %31 : vector<16x8xf32>
    %33 = vector.broadcast %24 : vector<1x8xf32> to vector<16x8xf32>
    %34 = arith.addf %33, %32 : vector<16x8xf32>
    %35 = arith.subf %22, %19 : vector<16x8xf32>
    %36 = arith.mulf %35, %35 : vector<16x8xf32>
    %37 = arith.subf %34, %36 : vector<16x8xf32>
    %38 = arith.mulf %37, %29 : vector<16x8xf32>
    %c1_i32 = arith.constant 1 : i32
    %39 = arith.muli %arg0, %c1_i32 : i32
    %40 = arith.addi %39, %arg1 : i32
    %c16_i32 = arith.constant 16 : i32
    %41 = arith.muli %40, %c16_i32 : i32
    %42 = tpu.iota {dimensions = array<i32: 0>} : vector<16x1xi32>
    %43 = vector.broadcast %41 : i32 to vector<16x1xi32>
    %44 = arith.addi %42, %43 : vector<16x1xi32>
    %c0_16 = arith.constant 0 : index
    %c0_17 = arith.constant 0 : index
    %45 = vector.load %arg7[%c0_16, %c0_17] : memref<16x8xf32, #tpu.memory_space<vmem>>, vector<16x8xf32>
    %c12_i32 = arith.constant 12 : i32
    %46 = vector.broadcast %c12_i32 : i32 to vector<16x1xi32>
    %47 = arith.cmpi slt, %44, %46 : vector<16x1xi32>
    %cst_18 = arith.constant 0.000000e+00 : f32
    %48 = vector.shape_cast %47 : vector<16x1xi1> to vector<16x1xi1>
    %49 = vector.broadcast %48 : vector<16x1xi1> to vector<16x8xi1>
    %50 = vector.broadcast %cst_18 : f32 to vector<16x8xf32>
    %51 = arith.select %49, %38, %50 : vector<16x8xi1>, vector<16x8xf32>
    %52 = arith.addf %45, %51 : vector<16x8xf32>
    %c0_19 = arith.constant 0 : index
    %c0_20 = arith.constant 0 : index
    %53 = vector.load %arg7[%c0_19, %c0_20] : memref<16x8xf32, #tpu.memory_space<vmem>>, vector<16x8xf32>
    tpu.vector_store %arg7[%c0_19, %c0_20], %52 {strides = array<i32>} : memref<16x8xf32, #tpu.memory_space<vmem>>, vector<16x8xf32>,
    %c0_i32_21 = arith.constant 0 : i32
    %54 = arith.cmpi eq, %arg1, %c0_i32_21 : i32
    %55 = arith.extui %54 : i1 to i32
    %c0_i32_22 = arith.constant 0 : i32
    %56 = arith.cmpi ne, %55, %c0_i32_22 : i32
    scf.if %56 {
      %c0_23 = arith.constant 0 : index
      %c0_24 = arith.constant 0 : index
      %57 = vector.load %arg7[%c0_23, %c0_24] : memref<16x8xf32, #tpu.memory_space<vmem>>, vector<16x8xf32>
      %cst_25 = arith.constant dense<0.000000e+00> : vector<16xf32>
      %58 = vector.multi_reduction <add>, %57, %cst_25 [1] : vector<16x8xf32> to vector<16xf32>
      %59 = vector.shape_cast %58 : vector<16xf32> to vector<16x1xf32>
      %cst_26 = arith.constant dense<0.000000e+00> : vector<1xf32>
      %60 = vector.multi_reduction <add>, %59, %cst_26 [0] : vector<16x1xf32> to vector<1xf32>
      %61 = vector.shape_cast %60 : vector<1xf32> to vector<1x1xf32>
      %cst_27 = arith.constant 0.000000e+00 : f32
      %62 = vector.broadcast %cst_27 : f32 to vector<8x128xf32>
      %cst_28 = arith.constant 0.0833333358 : f32
      %63 = vector.broadcast %cst_28 : f32 to vector<1x1xf32>
      %64 = arith.mulf %61, %63 : vector<1x1xf32>
      %65 = vector.broadcast %64 : vector<1x1xf32> to vector<8x128xf32>
      %66 = arith.addf %62, %65 : vector<8x128xf32>
      %c0_29 = arith.constant 0 : index
      %c0_30 = arith.constant 0 : index
      %67 = vector.load %arg6[%c0_29, %c0_30] : memref<8x128xf32, #tpu.memory_space<vmem>>, vector<8x128xf32>
      tpu.vector_store %arg6[%c0_29, %c0_30], %66 {strides = array<i32>} : memref<8x128xf32, #tpu.memory_space<vmem>>, vector<8x128xf32>,
    } else {
    }
    return
  }
  func.func @transform_0(%arg0: i32, %arg1: i32) -> (i32, i32) {
    %c1_i32 = arith.constant 1 : i32
    %0 = arith.muli %arg0, %c1_i32 : i32
    %1 = arith.addi %0, %arg1 : i32
    %c0_i32 = arith.constant 0 : i32
    %c0_i32_0 = arith.constant 0 : i32
    return %1, %c0_i32 : i32, i32
  }
  func.func @transform_1(%arg0: i32, %arg1: i32) -> (i32, i32) {
    %c1_i32 = arith.constant 1 : i32
    %0 = arith.muli %arg0, %c1_i32 : i32
    %1 = arith.addi %0, %arg1 : i32
    %c0_i32 = arith.constant 0 : i32
    %c0_i32_0 = arith.constant 0 : i32
    return %1, %c0_i32 : i32, i32
  }
  func.func @transform_2(%arg0: i32, %arg1: i32) -> (i32, i32) {
    %c0_i32 = arith.constant 0 : i32
    %c0_i32_0 = arith.constant 0 : i32
    %c0_i32_1 = arith.constant 0 : i32
    return %c0_i32, %c0_i32_0 : i32, i32
  }
  func.func @transform_3(%arg0: i32, %arg1: i32) -> (i32, i32) {
    %c0_i32 = arith.constant 0 : i32
    %c0_i32_0 = arith.constant 0 : i32
    %c0_i32_1 = arith.constant 0 : i32
    return %c0_i32, %c0_i32_0 : i32, i32
  }
  func.func @transform_4(%arg0: i32, %arg1: i32) -> (i32, i32) {
    %c0_i32 = arith.constant 0 : i32
    %c0_i32_0 = arith.constant 0 : i32
    return %arg0, %c0_i32 : i32, i32
  }
}

</mosaic_0001>

<llo_original>
// kernel: tpu_custom_call.1
$region0: #{tpu_custom_call.1}
  #allocation0 [shape = 'u32[]', space=smem, size = 0x4, offset = 0x4, fixed_abs, tag = 'smem constant byte address 0x4 - core index']
  #allocation1 [shape = 'u32[144,128]{1,0:T(1,128)}', space=vmem, size = 0x12000, scoped, tag = 'internal scratch']
  #allocation2 [shape = 'f32[16,8]{1,0:T(8,128)}', space=vmem, size = 0x2000, scoped, tag = 'scratch operand']
  %s0 = inlined_call_operand.vmem [shape: bf16[16,16], index: 0, kind: input, shape index: {}]
  %s1 = inlined_call_operand.vmem [shape: f32[16,8], index: 1, kind: input, shape index: {}]
  %s2 = inlined_call_operand.vmem [shape: f32[2,8], index: 2, kind: input, shape index: {}]
  %s3 = inlined_call_operand.hbm [shape: bf16[80,256], index: 3, kind: input, shape index: {}]
  %s4 = inlined_call_operand.hbm [shape: f32[8,128], index: 4, kind: output, shape index: {}]
  %s5 = sld [smem:[#allocation0]]
  $region38: #{tpu_custom_call.1} parent=0
    _
  %s7 = ssub.s32 1, %s5
  %s8 = scalar_select 0, %s7, %s5
  $region1: #{tpu_custom_call.1} parent=0
    #allocation3 [shape = 'u8[40960]{0}', space=vmem, size = 0xa000, scoped, tag = 'input window, operand 3, single buffered']
    #allocation4 [shape = 's32[1]{0}', space=sflag, size = 0x4, scoped, tag = 'scoped memory for tpu_custom_call.1']
    #allocation5 [shape = 's32[1]{0}', space=sflag, size = 0x4, scoped, tag = 'scoped memory for tpu_custom_call.1']
    #allocation6 [shape = 'u8[4096]{0}', space=vmem, size = 0x1000, scoped, tag = 'output window, operand 0, single buffered']
    %9 = vsyncpa [#allocation4], 0
    %10 = vsyncpa [#allocation5], 0
    // Predicated region
    $region2: #{tpu_custom_call.1} parent=1 // pred_check
      _
    $region3: #{tpu_custom_call.1} parent=1 // pred_check_branch
      %12 = sbr.rel (0) target = $region5
    $region4: #{tpu_custom_call.1} parent=1 // pred_region
      %s13 = sadd.s32 0, 0
      %s14 = smul.u32 2, %s13
      %p15 = scmp.lt.s32.totalorder %s14, 1
      %s16 = scalar_select %p15, %s14, 1
      %s17 = smul.addr %s16, 4
      %s18 = scalar_lea.vmem %s0, %s17
      %s19 = sadd.s32 0, 0
      %s20 = smul.u32 2, %s19
    $region5: #{tpu_custom_call.1} parent=1 // pred_fallthru
      _
    // Predicated region
    $region6: #{tpu_custom_call.1} parent=1 // pred_check
      _
    $region7: #{tpu_custom_call.1} parent=1 // pred_check_branch
      %22 = sbr.rel (0) target = $region9
    $region8: #{tpu_custom_call.1} parent=1 // pred_region
      %s23 = sadd.s32 0, 0
      %s24 = smul.u32 2, %s23
      %p25 = scmp.lt.s32.totalorder %s24, 1
      %s26 = scalar_select %p25, %s24, 1
      %s27 = smul.addr %s26, 8
      %s28 = scalar_lea.vmem %s1, %s27
      %s29 = sadd.s32 0, 0
      %s30 = smul.u32 2, %s29
    $region9: #{tpu_custom_call.1} parent=1 // pred_fallthru
      _
    // Predicated region
    $region10: #{tpu_custom_call.1} parent=1 // pred_check
      _
    $region11: #{tpu_custom_call.1} parent=1 // pred_check_branch
      %32 = sbr.rel (0) target = $region13
    $region12: #{tpu_custom_call.1} parent=1 // pred_region
      _
    $region13: #{tpu_custom_call.1} parent=1 // pred_fallthru
      _
    // Predicated region
    $region14: #{tpu_custom_call.1} parent=1 // pred_check
      _
    $region15: #{tpu_custom_call.1} parent=1 // pred_check_branch
      %34 = sbr.rel (0) target = $region17
    $region16: #{tpu_custom_call.1} parent=1 // pred_region
      %s36 = ssub.s32 1280, 1280
      %37 = vsyncadd [#allocation4], %s36
      %s38 = sshll.u32 [#allocation3], 4
      %s39 = int_to_ptr.vmem [resolvable:$true] %s38
      %44 = dma.hbm_to_vmem [thread:$0]  %s3, 1280, %s39, [#allocation4], 128, 128, 8
    $region17: #{tpu_custom_call.1} parent=1 // pred_fallthru
      _
    // Predicated region
    $region18: #{tpu_custom_call.1} parent=1 // pred_check
      _
    $region19: #{tpu_custom_call.1} parent=1 // pred_check_branch
      %46 = sbr.rel (0) target = $region21
    $region20: #{tpu_custom_call.1} parent=1 // pred_region
      %47 = dma.done [#allocation4], 1280
    $region21: #{tpu_custom_call.1} parent=1 // pred_fallthru
      _
    %s48 = sadd.s32 0, 0
    %s49 = smul.u32 2, %s48
    %p50 = scmp.lt.s32.totalorder %s49, 1
    %s51 = scalar_select %p50, %s49, 1
    %s52 = smul.addr %s51, 4
    %s53 = scalar_lea.vmem %s0, %s52
    %s54 = sadd.s32 0, 0
    %s55 = smul.u32 2, %s54
    %p56 = scmp.lt.s32.totalorder %s55, 1
    %s57 = scalar_select %p56, %s55, 1
    %s58 = smul.addr %s57, 8
    %s59 = scalar_lea.vmem %s1, %s58
    %s60 = sadd.s32 0, 0
    %s61 = smul.u32 2, %s60
    %p62 = scmp.lt.s32.totalorder %s61, 1
    %s63 = scalar_select %p62, %s61, 1
    %s64 = smul.addr %s63, 4
    %s65 = scalar_lea.vmem %s0, %s64
    %s66 = sadd.s32 0, 0
    %s67 = smul.u32 2, %s66
    %s68 = sadd.s32 0, 0
    %s69 = smul.u32 2, %s68
    %p70 = scmp.lt.s32.totalorder %s69, 1
    %s71 = scalar_select %p70, %s69, 1
    %s72 = smul.addr %s71, 8
    %s73 = scalar_lea.vmem %s1, %s72
    %s74 = sadd.s32 0, 0
    %s75 = smul.u32 2, %s74
    %p77 = scmp.eq.s32.totalorder 0, 0
    // Predicated region
    $region22: #{tpu_custom_call.1} parent=1 // pred_check
      %p78 = pneg %p77
    $region23: #{tpu_custom_call.1} parent=1 // pred_check_branch
      %80 = sbr.rel (%p78) target = $region25
    $region24: #{tpu_custom_call.1} parent=1 // pred_region
      %vm81 = vcmask 64512
      %82 = vst.msk [vmem:[#allocation2] sm:$0xff] %vm81, 0.0
      %83 = vst.msk [vmem:[#allocation2 + $0x8] sm:$0xff] %vm81, 0.0
    $region25: #{tpu_custom_call.1} parent=1 // pred_fallthru
      _
    %v84 = vld [vmem:[%s65] sm:$0xf]
    %v85 = vld [vmem:[%s65 + $0x4] sm:$0xf]
    %v86 = vld [vmem:[#allocation3] sm:$0xf]
    %v87 = vld [vmem:[#allocation3 + $0x8] sm:$0xf]
    %v88 = vld [vmem:[#allocation3 + $0x10] sm:$0x1]
    %v89 = vunpack.c.l.bf16 %v88
    %v90 = vlaneseq
    %v91 = vshrl.u32 %v90, 7
    %v92 = vsub.s32 0, %v91
    %v93 = vrot.slane %v89, %v92
    %v96 = vunpack.c.l.b16 %v84
    %v97 = vunpack.c.l.b16 %v85
    %v98 = vpack.c.b16 %v97, %v96
    %v101 = vunpack.c.l.b16 %v86
    %v102 = vunpack.c.l.b16 %v87
    %v103 = vpack.c.b16 %v102, %v101
    %vm105 = vcmask 130048
    %v107 = vsel %vm105, %v98, 0
    %109 = vmatprep.subr.bf16.mxu0 0
    %110 = vmatpush1.bf16.msra.mxu0 0
    %111 = vmatprep.subr.bf16.mxu0 0
    %112 = vmatpush1.bf16.msra.mxu0 0
    %113 = vmatprep.subr.bf16.mxu0 0
    %114 = vmatpush1.bf16.msra.mxu0 0
    %115 = vmatprep.subr.bf16.mxu0 0
    %116 = vmatpush1.bf16.msra.mxu0 0
    %117 = vmatprep.subr.bf16.mxu0 0
    %118 = vmatpush1.bf16.msra.mxu0 0
    %119 = vmatprep.subr.bf16.mxu0 0
    %120 = vmatpush1.bf16.msra.mxu0 0
    %121 = vmatprep.subr.bf16.mxu0 0
    %122 = vmatpush1.bf16.msra.mxu0 0
    %123 = vmatprep.subr.bf16.mxu0 0
    %124 = vmatpush1.bf16.msra.mxu0 %v103
    %125 = vmatprep.subr.bf16.mxu0 0
    %126 = vmatpush2.bf16.msra.mxu0 0
    %127 = vmatprep.subr.bf16.mxu0 0
    %128 = vmatpush2.bf16.msra.mxu0 0
    %129 = vmatprep.subr.bf16.mxu0 0
    %130 = vmatpush2.bf16.msra.mxu0 0
    %131 = vmatprep.subr.bf16.mxu0 0
    %132 = vmatpush2.bf16.msra.mxu0 0
    %133 = vmatprep.subr.bf16.mxu0 0
    %134 = vmatpush2.bf16.msra.mxu0 0
    %135 = vmatprep.subr.bf16.mxu0 0
    %136 = vmatpush2.bf16.msra.mxu0 0
    %137 = vmatprep.subr.bf16.mxu0 0
    %138 = vmatpush2.bf16.msra.mxu0 0
    %139 = vmatprep.subr.bf16.mxu0 0
    %140 = vmatpush2.bf16.msra.mxu0 0
    %141 = vmatprep.mubr.bf16.mxu0 0
    %142 = vmatmul.mubr.bf16.gmra.mxu0 %v107
    %v143 = vpop.f32.mrf.mxu0
    %v144 = vadd.f32 %v93, %v143
    %v145 = vpop.f32.mrf.mxu0
    %v146 = vpop.f32.mrf.mxu0
    %v147 = vadd.f32 %v93, %v146
    %v148 = vpop.f32.mrf.mxu0
    %149 = vdwg.mxu0
    %v150 = vmax.f32 %v144, 0.0
    %v151 = vmax.f32 %v147, 0.0
    %v152 = vld [vmem:[#allocation3 + $0x20] sm:$0xff]
    %v153 = vld [vmem:[#allocation3 + $0x28] sm:$0xff]
    %v154 = vld [vmem:[#allocation3 + $0x30] sm:$0xff]
    %v155 = vld [vmem:[#allocation3 + $0x38] sm:$0xff]
    %v156 = vld [vmem:[#allocation3 + $0x40] sm:$0x11]
    %v157 = vpack.c.bf16 %v151, %v150
    %v158 = vunpack.c.l.bf16 %v156
    %v159 = vunpack.c.h.bf16 %v156
    %v160 = vlaneseq
    %v161 = vshrl.u32 %v160, 7
    %v162 = vsub.s32 0, %v161
    %v163 = vrot.slane %v158, %v162
    %v164 = vlaneseq
    %v165 = vshrl.u32 %v164, 7
    %v166 = vsub.s32 0, %v165
    %v167 = vrot.slane %v159, %v166
    %v172 = vunpack.c.l.b16 %v152
    %v173 = vunpack.c.h.b16 %v152
    %v174 = vunpack.c.l.b16 %v153
    %v175 = vunpack.c.h.b16 %v153
    %v176 = vunpack.c.l.b16 %v154
    %v177 = vunpack.c.h.b16 %v154
    %v178 = vunpack.c.l.b16 %v155
    %v179 = vunpack.c.h.b16 %v155
    %v180 = vpack.c.b16 %v174, %v172
    %v181 = vpack.c.b16 %v175, %v173
    %v182 = vpack.c.b16 %v178, %v176
    %v183 = vpack.c.b16 %v179, %v177
    %vm188 = vcmask 261120
    %v190 = vsel %vm188, %v157, 0
    %192 = vmatprep.subr.bf16.mxu0 0
    %193 = vmatpush1.bf16.msra.mxu0 0
    %194 = vmatprep.subr.bf16.mxu0 0
    %195 = vmatpush1.bf16.msra.mxu0 0
    %196 = vmatprep.subr.bf16.mxu0 0
    %197 = vmatpush1.bf16.msra.mxu0 0
    %198 = vmatprep.subr.bf16.mxu0 0
    %199 = vmatpush1.bf16.msra.mxu0 0
    %200 = vmatprep.subr.bf16.mxu0 0
    %201 = vmatpush1.bf16.msra.mxu0 0
    %202 = vmatprep.subr.bf16.mxu0 0
    %203 = vmatpush1.bf16.msra.mxu0 0
    %204 = vmatprep.subr.bf16.mxu0 %v183
    %205 = vmatpush1.bf16.msra.mxu0 %v182
    %206 = vmatprep.subr.bf16.mxu0 %v181
    %207 = vmatpush1.bf16.msra.mxu0 %v180
    %208 = vmatprep.subr.bf16.mxu0 0
    %209 = vmatpush2.bf16.msra.mxu0 0
    %210 = vmatprep.subr.bf16.mxu0 0
    %211 = vmatpush2.bf16.msra.mxu0 0
    %212 = vmatprep.subr.bf16.mxu0 0
    %213 = vmatpush2.bf16.msra.mxu0 0
    %214 = vmatprep.subr.bf16.mxu0 0
    %215 = vmatpush2.bf16.msra.mxu0 0
    %216 = vmatprep.subr.bf16.mxu0 0
    %217 = vmatpush2.bf16.msra.mxu0 0
    %218 = vmatprep.subr.bf16.mxu0 0
    %219 = vmatpush2.bf16.msra.mxu0 0
    %220 = vmatprep.subr.bf16.mxu0 0
    %221 = vmatpush2.bf16.msra.mxu0 0
    %222 = vmatprep.subr.bf16.mxu0 0
    %223 = vmatpush2.bf16.msra.mxu0 0
    %224 = vmatprep.mubr.bf16.mxu0 0
    %225 = vmatmul.mubr.bf16.gmra.mxu0 %v190
    %v226 = vpop.f32.mrf.mxu0
    %v227 = vadd.f32 %v163, %v226
    %v228 = vpop.f32.mrf.mxu0
    %v229 = vadd.f32 %v167, %v228
    %v230 = vpop.f32.mrf.mxu0
    %v231 = vadd.f32 %v163, %v230
    %v232 = vpop.f32.mrf.mxu0
    %v233 = vadd.f32 %v167, %v232
    %234 = vdwg.mxu0
    %v235 = vtanh.pop %v229
    %v236 = vtanh.pop %v233
    %v237 = vld [vmem:[%s73] sm:$0xff]
    %v238 = vld [vmem:[%s73 + $0x8] sm:$0xff]
    %v239 = vld [vmem:[%s2] sm:$0x1]
    %v240 = vld [vmem:[%s2 + $0x1] sm:$0x1]
    %v241 = vsub.f32 0.0, %v235
    %v242 = vsub.f32 0.0, %v236
    %v243 = vmul.f32 %v241, 1.442695
    %v244 = vpow.pop %v243
    %v245 = vmul.f32 %v242, 1.442695
    %v246 = vpow.pop %v245
    %v247 = vmul.f32 %v244, 0.5
    %v248 = vmul.f32 %v246, 0.5
    %v249 = vlaneseq
    %v250 = vshrl.u32 %v249, 7
    %v251 = vsub.s32 0, %v250
    %v252 = vrot.slane %v239, %v251
    %v253 = vsub.f32 %v252, %v227
    %v254 = vsub.f32 %v252, %v231
    %v255 = vmul.f32 %v253, %v253
    %v256 = vmul.f32 %v254, %v254
    %v257 = vlaneseq
    %v258 = vshrl.u32 %v257, 7
    %v259 = vsub.s32 0, %v258
    %v260 = vrot.slane %v240, %v259
    %v261 = vadd.f32 %v260, %v255
    %v262 = vadd.f32 %v260, %v256
    %v263 = vsub.f32 %v237, %v227
    %v264 = vsub.f32 %v238, %v231
    %v265 = vmul.f32 %v263, %v263
    %v266 = vmul.f32 %v264, %v264
    %v267 = vsub.f32 %v261, %v265
    %v268 = vsub.f32 %v262, %v266
    %v269 = vmul.f32 %v267, %v247
    %v270 = vmul.f32 %v268, %v248
    %s271 = sadd.s32 0, 0
    %s272 = smul.u32 %s271, 16
    %v273 = vlaneseq
    %v274 = vshrl.u32 %v273, 7
    %v275 = vadd.s32 %v274, 8
    %v276 = vstv %s272
    %v277 = vadd.s32 %v274, %v276
    %v278 = vadd.s32 %v275, %v276
    %v279 = vld [vmem:[#allocation2] sm:$0xff]
    %v280 = vld [vmem:[#allocation2 + $0x8] sm:$0xff]
    %vm281 = vcmp.lt.s32.totalorder %v277, 12
    %vm282 = vcmp.lt.s32.totalorder %v278, 12
    %v283 = vsel %vm281, 1, 0
    %v284 = vsel %vm282, 1, 0
    %vm285 = vcmp.eq.s32.totalorder %v283, 1
    %vm286 = vcmp.eq.s32.totalorder %v284, 1
    %v287 = vsel %vm285, %v269, 0.0
    %v288 = vsel %vm286, %v270, 0.0
    %v289 = vadd.f32 %v279, %v287
    %v290 = vadd.f32 %v280, %v288
    %vm291 = vcmask 64512
    %292 = vst.msk [vmem:[#allocation2] sm:$0xff] %vm291, %v289
    %293 = vst.msk [vmem:[#allocation2 + $0x8] sm:$0xff] %vm291, %v290
    // Predicated region
    $region26: #{tpu_custom_call.1} parent=1 // pred_check
      %p294 = pneg %p77
    $region27: #{tpu_custom_call.1} parent=1 // pred_check_branch
      %296 = sbr.rel (%p294) target = $region29
    $region28: #{tpu_custom_call.1} parent=1 // pred_region
      %v297 = vld [vmem:[#allocation2] sm:$0xff]
      %v298 = vld [vmem:[#allocation2 + $0x8] sm:$0xff]
      %v299 = vsel %vm291, %v297, 0.0
      %300 = vadd.xlane.f32.xlu0 %v299
      %v301 = vpop.xlane.xlu0 %300
      %v302 = vsel %vm291, %v298, 0.0
      %303 = vadd.xlane.f32.xlu0 %v302
      %v304 = vpop.xlane.xlu0 %303
      %v305 = vadd.f32 %v301, %v304
      %v306 = vrot.slane %v305, 4
      %v307 = vadd.f32 %v305, %v306
      %v308 = vrot.slane %v307, 2
      %v309 = vadd.f32 %v307, %v308
      %v310 = vrot.slane %v309, 1
      %v311 = vadd.f32 %v309, %v310
      %v312 = vmul.f32 %v311, 0.083333336
      %v313 = vadd.f32 %v312, 0.0
      %314 = vst [vmem:[#allocation6] sm:$0xff] %v313
    $region29: #{tpu_custom_call.1} parent=1 // pred_fallthru
      _
    // Predicated region
    $region30: #{tpu_custom_call.1} parent=1 // pred_check
      _
    $region31: #{tpu_custom_call.1} parent=1 // pred_check_branch
      %316 = sbr.rel (0) target = $region33
    $region32: #{tpu_custom_call.1} parent=1 // pred_region
      %s318 = ssub.s32 128, 128
      %319 = vsyncadd [#allocation5], %s318
      %s321 = sshll.u32 [#allocation6], 4
      %s322 = int_to_ptr.vmem [resolvable:$true] %s321
      %324 = dma.vmem_to_hbm [thread:$0]  %s322, 128, %s4, [#allocation5]
    $region33: #{tpu_custom_call.1} parent=1 // pred_fallthru
      _
    // Predicated region
    $region34: #{tpu_custom_call.1} parent=1 // pred_check
      _
    $region35: #{tpu_custom_call.1} parent=1 // pred_check_branch
      %326 = sbr.rel (0) target = $region37
    $region36: #{tpu_custom_call.1} parent=1 // pred_region
      %327 = dma.done [#allocation5], 128
    $region37: #{tpu_custom_call.1} parent=1 // pred_fallthru
      _
    %328 = vsyncpa [#allocation4], 1
    %329 = vsyncpa [#allocation5], 1

</llo_original>
